<compile_context>
chip_gen: v6e
topology: v6e:2x2x1
jax: 0.10.0
libtpu: 0.0.40
codegen_flags: <defaults>
</compile_context>

<pallas_src>
import functools

import jax
import jax.numpy as jnp
from jax import lax
from jax.experimental import pallas as pl
from jax.experimental.pallas import tpu as pltpu

_LANES = 128
_SUBLANES = 8


def _itself_loss_kernel(x_ref, o_ref, *, rows_total, tile_rows, grid_t):
    """Accumulate per-core partial sums of x into a (1, 8, 128) VMEM block."""
    c = pl.program_id(0)   # parallel (megacore) axis
    t = pl.program_id(1)   # arbitrary (reduction) axis

    @pl.when(t == 0)
    def _():
        o_ref[...] = jnp.zeros_like(o_ref)

    # Logical (unclamped) tile id, used for the validity mask.  The input
    # index_map clamps the physical tile so the DMA never walks off the
    # array; tiles whose logical id is past the real data are fully masked
    # to zero here, as is the unspecified padded region of a partial tile.
    block_idx = c * grid_t + t
    row_base = block_idx * tile_rows
    row_ids = lax.broadcasted_iota(jnp.int32, (tile_rows, _LANES), 0) + row_base
    valid = row_ids < rows_total

    # Per-tile upcast to f32 (needed for the adds anyway; hidden under DMA).
    xf = x_ref[...].astype(jnp.float32)
    xm = jnp.where(valid, xf, 0.0)

    # Pure vreg adds (VPU): fold the row tile down to an (8, 128) partial sum.
    partial = xm.reshape(tile_rows // _SUBLANES, _SUBLANES, _LANES).sum(axis=0)
    o_ref[...] += partial[None, :, :]


def itself_loss(x, negation: bool = True, *, tile_rows: int = 2048):
    """JAX/Pallas equivalent of Itself_loss.forward: loss = (-)sum(x)."""
    orig_dtype = x.dtype
    sign = -1.0 if negation else 1.0

    flat = jnp.ravel(x)                  # free bitcast for contiguous inputs
    n = flat.shape[0]
    rows = n // _LANES

    if rows == 0:
        # Sub-vreg input: not worth a kernel launch.
        total = jnp.sum(flat.astype(jnp.float32))
        return (sign * total).astype(orig_dtype)

    main = rows * _LANES
    if main == n:
        x2d = flat.reshape(rows, _LANES)          # zero-copy reshape
        tail_sum = jnp.float32(0.0)
    else:
        # Ragged tail (< 128 elements): sum it in plain JAX.  The prefix slice
        # of the lane-aligned head costs one small copy only on this rare path.
        x2d = flat[:main].reshape(rows, _LANES)
        tail_sum = jnp.sum(flat[main:].astype(jnp.float32))

    # Round the row tile to the dtype's sublane packing (8 f32 / 16 bf16 / 32 int8).
    itemsize = jnp.dtype(x.dtype).itemsize
    packing = max(_SUBLANES, 32 // max(1, itemsize))
    tile_rows = max(packing, min(tile_rows, rows))
    tile_rows = ((tile_rows + packing - 1) // packing) * packing

    num_tiles = pl.cdiv(rows, tile_rows)
    # Split across 2 TensorCores when there is more than one tile; harmless
    # serial loop on single-TC chips.
    n_splits = 2 if num_tiles >= 2 else 1
    grid_t = pl.cdiv(num_tiles, n_splits)

    kernel = functools.partial(
        _itself_loss_kernel,
        rows_total=rows,
        tile_rows=tile_rows,
        grid_t=grid_t,
    )

    partials = pl.pallas_call(
        kernel,
        out_shape=jax.ShapeDtypeStruct((n_splits, _SUBLANES, _LANES), jnp.float32),
        grid_spec=pltpu.PrefetchScalarGridSpec(
            num_scalar_prefetch=0,
            grid=(n_splits, grid_t),
            in_specs=[
                pl.BlockSpec(
                    (tile_rows, _LANES),
                    # Clamp so the DMA always targets a real tile; duplicated
                    # tiles are masked to zero inside the kernel.
                    lambda c, t: (jnp.minimum(c * grid_t + t, num_tiles - 1), 0),
                ),
            ],
            out_specs=pl.BlockSpec((1, _SUBLANES, _LANES), lambda c, t: (c, 0, 0)),
        ),
        compiler_params=pltpu.CompilerParams(
            dimension_semantics=("parallel", "arbitrary"),
        ),
    )(x2d)

    # Tiny final reduce (<= 2*1024 elements) + negation fuse into wrapper XLA ops.
    total = jnp.sum(partials) + tail_sum
    return (sign * total).astype(orig_dtype)


if __name__ == "__main__":
    key = jax.random.PRNGKey(0)

    # Primary test: the module's expected NCHW-style input.
    x = jax.random.normal(key, (2, 4, 16, 16), dtype=jnp.float32)
    loss = jax.block_until_ready(itself_loss(x, negation=True))
    ref = -jnp.sum(x)
    assert jnp.allclose(loss, ref, rtol=1e-5, atol=1e-5), (loss, ref)

    loss_pos = jax.block_until_ready(itself_loss(x, negation=False))
    assert jnp.allclose(loss_pos, jnp.sum(x), rtol=1e-5, atol=1e-5), (loss_pos,)

    # Ragged shape: exercises the in-kernel partial-tile mask + tail path.
    k1, k2 = jax.random.split(key)
    xr = jax.random.normal(k1, (3, 5, 7, 11), dtype=jnp.float32)
    loss_r = jax.block_until_ready(itself_loss(xr, negation=True))
    assert jnp.allclose(loss_r, -jnp.sum(xr), rtol=1e-5, atol=1e-5), (loss_r,)

    # Larger input: exercises multi-tile streaming + the 2-way core split.
    xl = jax.random.normal(k2, (8, 64, 64, 64), dtype=jnp.float32)
    loss_l = jax.block_until_ready(itself_loss(xl, negation=True))
    assert jnp.allclose(loss_l, -jnp.sum(xl), rtol=1e-4, atol=5e-2), (loss_l,)

    print("KERNEL_OK")
</pallas_src>

<mosaic_0001>
module attributes {stable_mosaic.version = 11 : i64} {
  func.func @_itself_loss_kernel(%arg0: i32, %arg1: i32, %arg2: memref<16x128xf32, #tpu.memory_space<vmem>>, %arg3: memref<1x8x128xf32, #tpu.memory_space<vmem>>) attributes {dimension_semantics = [#tpu.dimension_semantics<parallel>, #tpu.dimension_semantics<arbitrary>], iteration_bounds = array<i64: 1, 1>, scalar_prefetch = 0 : i64, scratch_operands = 0 : i64, tpu.core_type = #tpu.core_type<tc>, window_params = [{transform_indices = @transform_0, window_bounds = array<i64: 16, 128>}, {transform_indices = @transform_1, window_bounds = array<i64: 1, 8, 128>}]} {
    %c0_i32 = arith.constant 0 : i32
    %0 = arith.cmpi eq, %arg1, %c0_i32 : i32
    %1 = arith.extui %0 : i1 to i32
    %c0_i32_0 = arith.constant 0 : i32
    %2 = arith.cmpi ne, %1, %c0_i32_0 : i32
    scf.if %2 {
      %cst_10 = arith.constant 0.000000e+00 : f32
      %20 = vector.broadcast %cst_10 : f32 to vector<1x8x128xf32>
      %c0_11 = arith.constant 0 : index
      %c0_12 = arith.constant 0 : index
      %c0_13 = arith.constant 0 : index
      %21 = vector.load %arg3[%c0_11, %c0_12, %c0_13] : memref<1x8x128xf32, #tpu.memory_space<vmem>>, vector<1x8x128xf32>
      tpu.vector_store %arg3[%c0_11, %c0_12, %c0_13], %20 {strides = array<i32>} : memref<1x8x128xf32, #tpu.memory_space<vmem>>, vector<1x8x128xf32>,
    } else {
    }
    %c1_i32 = arith.constant 1 : i32
    %3 = arith.muli %arg0, %c1_i32 : i32
    %4 = arith.addi %3, %arg1 : i32
    %c16_i32 = arith.constant 16 : i32
    %5 = arith.muli %4, %c16_i32 : i32
    %6 = tpu.iota {dimensions = array<i32: 0>} : vector<16x128xi32>
    %7 = vector.broadcast %5 : i32 to vector<16x128xi32>
    %8 = arith.addi %6, %7 : vector<16x128xi32>
    %c16_i32_1 = arith.constant 16 : i32
    %9 = vector.broadcast %c16_i32_1 : i32 to vector<16x128xi32>
    %10 = arith.cmpi slt, %8, %9 : vector<16x128xi32>
    %c0 = arith.constant 0 : index
    %c0_2 = arith.constant 0 : index
    %11 = vector.load %arg2[%c0, %c0_2] : memref<16x128xf32, #tpu.memory_space<vmem>>, vector<16x128xf32>
    %cst = arith.constant 0.000000e+00 : f32
    %12 = vector.broadcast %cst : f32 to vector<16x128xf32>
    %13 = arith.select %10, %11, %12 : vector<16x128xi1>, vector<16x128xf32>
    %14 = vector.shape_cast %13 : vector<16x128xf32> to vector<2x8x128xf32>
    %cst_3 = arith.constant dense<0.000000e+00> : vector<8x128xf32>
    %15 = vector.multi_reduction <add>, %14, %cst_3 [0] : vector<2x8x128xf32> to vector<8x128xf32>
    %c0_4 = arith.constant 0 : index
    %c0_5 = arith.constant 0 : index
    %c0_6 = arith.constant 0 : index
    %16 = vector.load %arg3[%c0_4, %c0_5, %c0_6] : memref<1x8x128xf32, #tpu.memory_space<vmem>>, vector<1x8x128xf32>
    %17 = vector.shape_cast %15 : vector<8x128xf32> to vector<1x8x128xf32>
    %18 = arith.addf %16, %17 : vector<1x8x128xf32>
    %c0_7 = arith.constant 0 : index
    %c0_8 = arith.constant 0 : index
    %c0_9 = arith.constant 0 : index
    %19 = vector.load %arg3[%c0_7, %c0_8, %c0_9] : memref<1x8x128xf32, #tpu.memory_space<vmem>>, vector<1x8x128xf32>
    tpu.vector_store %arg3[%c0_7, %c0_8, %c0_9], %18 {strides = array<i32>} : memref<1x8x128xf32, #tpu.memory_space<vmem>>, vector<1x8x128xf32>,
    return
  }
  func.func @transform_0(%arg0: i32, %arg1: i32) -> (i32, i32) {
    %c1_i32 = arith.constant 1 : i32
    %0 = arith.muli %arg0, %c1_i32 : i32
    %1 = arith.addi %0, %arg1 : i32
    %c0_i32 = arith.constant 0 : i32
    %2 = arith.minsi %1, %c0_i32 : i32
    %c0_i32_0 = arith.constant 0 : i32
    %c0_i32_1 = arith.constant 0 : i32
    return %2, %c0_i32_0 : i32, i32
  }
  func.func @transform_1(%arg0: i32, %arg1: i32) -> (i32, i32, i32) {
    %c0_i32 = arith.constant 0 : i32
    %c0_i32_0 = arith.constant 0 : i32
    %c0_i32_1 = arith.constant 0 : i32
    return %arg0, %c0_i32, %c0_i32_0 : i32, i32, i32
  }
}

</mosaic_0001>

<llo_original>
// kernel: tpu_custom_call.1
$region0: #{tpu_custom_call.1}
  #allocation0 [shape = 'u32[]', space=smem, size = 0x4, offset = 0x4, fixed_abs, tag = 'smem constant byte address 0x4 - core index']
  #allocation1 [shape = 'u32[144,128]{1,0:T(1,128)}', space=vmem, size = 0x12000, scoped, tag = 'internal scratch']
  %s0 = inlined_call_operand.hbm [shape: f32[16,128], index: 0, kind: input, shape index: {}]
  %s1 = inlined_call_operand.hbm [shape: f32[1,8,128], index: 1, kind: output, shape index: {}]
  %s2 = sld [smem:[#allocation0]]
  $region22: #{tpu_custom_call.1} parent=0
    _
  %s4 = ssub.s32 1, %s2
  %s5 = scalar_select 0, %s4, %s2
  $region1: #{tpu_custom_call.1} parent=0
    #allocation2 [shape = 'u8[8192]{0}', space=vmem, size = 0x2000, scoped, tag = 'input window, operand 0, single buffered']
    #allocation3 [shape = 's32[1]{0}', space=sflag, size = 0x4, scoped, tag = 'scoped memory for tpu_custom_call.1']
    #allocation4 [shape = 's32[1]{0}', space=sflag, size = 0x4, scoped, tag = 'scoped memory for tpu_custom_call.1']
    #allocation5 [shape = 'u8[4096]{0}', space=vmem, size = 0x1000, scoped, tag = 'output window, operand 0, single buffered']
    %6 = vsyncpa [#allocation3], 0
    %7 = vsyncpa [#allocation4], 0
    // Predicated region
    $region2: #{tpu_custom_call.1} parent=1 // pred_check
      _
    $region3: #{tpu_custom_call.1} parent=1 // pred_check_branch
      %9 = sbr.rel (0) target = $region5
    $region4: #{tpu_custom_call.1} parent=1 // pred_region
      %s10 = sadd.s32 0, 0
      %p11 = scmp.lt.s32.totalorder %s10, 0
      %s12 = scalar_select %p11, %s10, 0
      %s13 = smul.u32 2, %s12
      %s15 = ssub.s32 256, 256
      %16 = vsyncadd [#allocation3], %s15
      %s17 = smul.addr %s13, 128
      %s18 = scalar_lea.hbm %s0, %s17
      %s19 = sshll.u32 [#allocation2], 4
      %s20 = int_to_ptr.vmem [resolvable:$true] %s19
      %25 = dma.hbm_to_vmem [thread:$0]  %s18, 256, %s20, [#allocation3], 128, 128, 8
    $region5: #{tpu_custom_call.1} parent=1 // pred_fallthru
      _
    // Predicated region
    $region6: #{tpu_custom_call.1} parent=1 // pred_check
      _
    $region7: #{tpu_custom_call.1} parent=1 // pred_check_branch
      %27 = sbr.rel (0) target = $region9
    $region8: #{tpu_custom_call.1} parent=1 // pred_region
      %28 = dma.done [#allocation3], 256
    $region9: #{tpu_custom_call.1} parent=1 // pred_fallthru
      _
    %s29 = sadd.s32 0, 0
    %p30 = scmp.lt.s32.totalorder %s29, 0
    %s31 = scalar_select %p30, %s29, 0
    %s32 = smul.u32 2, %s31
    %p33 = scmp.eq.s32.totalorder 0, 0
    // Predicated region
    $region10: #{tpu_custom_call.1} parent=1 // pred_check
      %p34 = pneg %p33
    $region11: #{tpu_custom_call.1} parent=1 // pred_check_branch
      %36 = sbr.rel (%p34) target = $region13
    $region12: #{tpu_custom_call.1} parent=1 // pred_region
      %37 = vst [vmem:[#allocation5] sm:$0xff] 0.0
    $region13: #{tpu_custom_call.1} parent=1 // pred_fallthru
      _
    %s38 = sadd.s32 0, 0
    %s39 = smul.u32 %s38, 16
    %v40 = vlaneseq
    %v41 = vshrl.u32 %v40, 7
    %v42 = vadd.s32 %v41, 8
    %v43 = vstv %s39
    %v44 = vadd.s32 %v41, %v43
    %v45 = vadd.s32 %v42, %v43
    %vm46 = vcmp.lt.s32.totalorder %v44, 16
    %vm47 = vcmp.lt.s32.totalorder %v45, 16
    %v48 = vld [vmem:[#allocation2] sm:$0xff]
    %v49 = vld [vmem:[#allocation2 + $0x8] sm:$0xff]
    %v50 = vsel %vm46, %v48, 0.0
    %v51 = vsel %vm47, %v49, 0.0
    %v52 = vadd.f32 %v50, %v51
    %v53 = vld [vmem:[#allocation5] sm:$0xff]
    %v54 = vadd.f32 %v53, %v52
    %55 = vst [vmem:[#allocation5] sm:$0xff] %v54
    // Predicated region
    $region14: #{tpu_custom_call.1} parent=1 // pred_check
      _
    $region15: #{tpu_custom_call.1} parent=1 // pred_check_branch
      %57 = sbr.rel (0) target = $region17
    $region16: #{tpu_custom_call.1} parent=1 // pred_region
      %s59 = ssub.s32 128, 128
      %60 = vsyncadd [#allocation4], %s59
      %s62 = sshll.u32 [#allocation5], 4
      %s63 = int_to_ptr.vmem [resolvable:$true] %s62
      %65 = dma.vmem_to_hbm [thread:$0]  %s63, 128, %s1, [#allocation4]
    $region17: #{tpu_custom_call.1} parent=1 // pred_fallthru
      _
    // Predicated region
    $region18: #{tpu_custom_call.1} parent=1 // pred_check
      _
    $region19: #{tpu_custom_call.1} parent=1 // pred_check_branch
      %67 = sbr.rel (0) target = $region21
    $region20: #{tpu_custom_call.1} parent=1 // pred_region
      %68 = dma.done [#allocation4], 128
    $region21: #{tpu_custom_call.1} parent=1 // pred_fallthru
      _
    %69 = vsyncpa [#allocation3], 1
    %70 = vsyncpa [#allocation4], 1

</llo_original>
